<compile_context>
chip_gen: v7x
topology: tpu7x:2x2x1
jax: 0.10.0
libtpu: 0.0.40
codegen_flags: <defaults>
</compile_context>

<pallas_src>
import math
from functools import partial

import jax
import jax.numpy as jnp
from jax.experimental import pallas as pl
from jax.experimental.pallas import tpu as pltpu

BN_EPS = 1e-5
LANE = 128
VMEM_LIMIT = 32 * 1024 * 1024


def _round_up(x, m):
    return (x + m - 1) // m * m


def _row_tile(r, cap=256):
    """Largest multiple of 16 (fallback 8) that divides r and is <= cap."""
    best = None
    for step in (16, 8):
        for t in range(step, min(r, cap) + 1, step):
            if r % t == 0:
                best = t
        if best is not None:
            return best
    raise ValueError("row count must be a multiple of 8")


# --------------------------- Pallas kernels ---------------------------------

def _conv_stats_kernel(p_ref, w_ref, y_ref, stats_ref):
    # Conv tile as one MXU matmul (bf16 inputs, f32 accumulate).  Also emit the
    # per-tile sum / sum-of-squares needed for train-mode BatchNorm statistics
    # while the tile is already resident in VMEM.
    acc = jnp.dot(p_ref[...], w_ref[...], preferred_element_type=jnp.float32)
    y_ref[...] = acc.astype(y_ref.dtype)
    s = jnp.sum(acc, axis=0, keepdims=True)            # (1, Cp)
    ss = jnp.sum(acc * acc, axis=0, keepdims=True)      # (1, Cp)
    stats_ref[...] = jnp.concatenate([s, ss], axis=0)[None]   # (1, 2, Cp)


def _bn_relu_pool_kernel(y_ref, mean_ref, invstd_ref, o_ref, *, pk, Ho, Wo, C):
    # One (n, pooled-d-slab) worth of conv output: (pk*H*W, C) rows in (dd,h,w)
    # order.  Normalize (batch stats), ReLU, then average-pool the pk^3 windows.
    yt = y_ref[0]                                            # (pk*H*W, C)
    xn = jnp.maximum((yt - mean_ref[...]) * invstd_ref[...], 0.0)
    xw = xn.reshape(pk, Ho, pk, Wo, pk, C)                   # (dd,ho,hh,wo,ww,C)
    o_ref[0] = jnp.mean(xw, axis=(0, 2, 4)).reshape(Ho * Wo, C)


def _bn_relu_kernel(y_ref, mean_ref, invstd_ref, o_ref):
    o_ref[...] = jnp.maximum((y_ref[...] - mean_ref[...]) * invstd_ref[...], 0.0)


# ------------------------- pallas_call wrappers ------------------------------

def _conv_stats(patches, w2d, *, tile_r):
    R, Kp = patches.shape
    Cp = w2d.shape[1]
    nt = R // tile_r
    cost = pl.CostEstimate(
        flops=2 * R * Kp * Cp,
        transcendentals=0,
        bytes_accessed=int(patches.size * patches.dtype.itemsize
                           + w2d.size * w2d.dtype.itemsize
                           + R * Cp * 4 + nt * 2 * Cp * 4),
    )
    return pl.pallas_call(
        _conv_stats_kernel,
        out_shape=(
            jax.ShapeDtypeStruct((R, Cp), jnp.float32),        # conv output
            jax.ShapeDtypeStruct((nt, 2, Cp), jnp.float32),    # per-tile sum/sumsq
        ),
        grid=(nt,),
        in_specs=[
            pl.BlockSpec((tile_r, Kp), lambda i: (i, 0)),
            pl.BlockSpec((Kp, Cp), lambda i: (0, 0)),          # weights stay resident
        ],
        out_specs=[
            pl.BlockSpec((tile_r, Cp), lambda i: (i, 0)),
            pl.BlockSpec((1, 2, Cp), lambda i: (i, 0, 0)),
        ],
        compiler_params=pltpu.CompilerParams(
            dimension_semantics=("parallel",),
            vmem_limit_bytes=VMEM_LIMIT,
        ),
        cost_estimate=cost,
    )(patches, w2d)


def _bn_relu_pool(y_slabs, mean, invstd, *, pk, Ho, Wo):
    S, rows, Cp = y_slabs.shape          # S = N*Do, rows = pk*H*W
    return pl.pallas_call(
        partial(_bn_relu_pool_kernel, pk=pk, Ho=Ho, Wo=Wo, C=Cp),
        out_shape=jax.ShapeDtypeStruct((S, Ho * Wo, Cp), jnp.float32),
        grid=(S,),
        in_specs=[
            pl.BlockSpec((1, rows, Cp), lambda i: (i, 0, 0)),
            pl.BlockSpec((1, Cp), lambda i: (0, 0)),
            pl.BlockSpec((1, Cp), lambda i: (0, 0)),
        ],
        out_specs=pl.BlockSpec((1, Ho * Wo, Cp), lambda i: (i, 0, 0)),
        compiler_params=pltpu.CompilerParams(
            dimension_semantics=("parallel",),
            vmem_limit_bytes=VMEM_LIMIT,
        ),
    )(y_slabs, mean, invstd)


def _bn_relu(y, mean, invstd, *, tile_r):
    R, Cp = y.shape
    return pl.pallas_call(
        _bn_relu_kernel,
        out_shape=jax.ShapeDtypeStruct((R, Cp), jnp.float32),
        grid=(R // tile_r,),
        in_specs=[
            pl.BlockSpec((tile_r, Cp), lambda i: (i, 0)),
            pl.BlockSpec((1, Cp), lambda i: (0, 0)),
            pl.BlockSpec((1, Cp), lambda i: (0, 0)),
        ],
        out_specs=pl.BlockSpec((tile_r, Cp), lambda i: (i, 0)),
        compiler_params=pltpu.CompilerParams(
            dimension_semantics=("parallel",),
            vmem_limit_bytes=VMEM_LIMIT,
        ),
    )(y, mean, invstd)


# ------------------------------ forward --------------------------------------

def conv_down_forward(x_ncdhw, weight, bias, *, down=True, pool_kernel=2):
    """Forward pass of conv_down. x: (N, Cin, D, H, W); weight: (Cout, Cin, 3, 3, 3)."""
    N, Cin, D, H, W = x_ncdhw.shape
    Cout = weight.shape[0]
    K = 27 * Cin
    Kp = _round_up(K, LANE)
    Cp = _round_up(Cout, LANE)
    R = N * D * H * W
    assert R % 8 == 0, "N*D*H*W must be a multiple of 8"

    # Conv bias is exactly cancelled by train-mode BatchNorm mean subtraction.
    del bias

    # NCDHW -> NDHWC + spatial zero-pad (conv padding=1).  Layout glue only.
    x = jnp.transpose(x_ncdhw, (0, 2, 3, 4, 1)).astype(jnp.float32)
    xp = jnp.pad(x, ((0, 0), (1, 1), (1, 1), (1, 1), (0, 0)))

    # im2col patch matrix, zero-padded to lane-aligned K, cast to bf16 (halves DMA).
    # TODO(synk): for large Cin the 27x im2col blow-up should move in-kernel
    # (halo-window DMA of the padded input + in-VMEM patch assembly).
    slabs = []
    for kd in range(3):
        for kh in range(3):
            for kw in range(3):
                slabs.append(xp[:, kd:kd + D, kh:kh + H, kw:kw + W, :])
    patches = jnp.concatenate(slabs, axis=-1).reshape(R, K)
    patches = jnp.pad(patches, ((0, 0), (0, Kp - K))).astype(jnp.bfloat16)

    # (Cout,Cin,kd,kh,kw) -> (K, Cout), zero-padded to (Kp, Cp), bf16.
    w2d = jnp.transpose(weight, (2, 3, 4, 1, 0)).reshape(K, Cout).astype(jnp.float32)
    w2d = jnp.pad(w2d, ((0, Kp - K), (0, Cp - Cout))).astype(jnp.bfloat16)

    tile_r = _row_tile(R)

    # Pass 1: conv (MXU) + per-tile partial sums for global batch statistics.
    y, stats = _conv_stats(patches, w2d, tile_r=tile_r)

    # Tiny global reduction of per-tile partials (pure JAX, O(num_tiles * Cp)).
    sums = jnp.sum(stats[:, 0, :], axis=0)
    sumsq = jnp.sum(stats[:, 1, :], axis=0)
    mean_v = sums / R
    var_v = jnp.maximum(sumsq / R - mean_v * mean_v, 0.0)   # biased var (PyTorch BN norm)
    invstd_v = jax.lax.rsqrt(var_v + BN_EPS)
    mean = mean_v.reshape(1, Cp)
    invstd = invstd_v.reshape(1, Cp)

    if down:
        pk = pool_kernel
        # TODO(synk): assumes D, H, W divisible by pool_kernel (PyTorch AvgPool3d floors).
        assert D % pk == 0 and H % pk == 0 and W % pk == 0
        Do, Ho, Wo = D // pk, H // pk, W // pk
        # Free (contiguous) reshape: one (n, pooled-d-slab) of pk full HW planes per grid step.
        y_slabs = y.reshape(N * Do, pk * H * W, Cp)
        pooled = _bn_relu_pool(y_slabs, mean, invstd, pk=pk, Ho=Ho, Wo=Wo)
        out = pooled.reshape(N, Do, Ho, Wo, Cp)[..., :Cout]
    else:
        yn = _bn_relu(y, mean, invstd, tile_r=tile_r)
        out = yn.reshape(N, D, H, W, Cp)[..., :Cout]

    return jnp.transpose(out, (0, 4, 1, 2, 3))  # back to NCDHW


# --------------------------- pure-JAX reference -------------------------------

def _reference(x, weight, bias, down=True, pk=2):
    y = jax.lax.conv_general_dilated(
        x, weight, window_strides=(1, 1, 1), padding=[(1, 1)] * 3,
        dimension_numbers=("NCDHW", "OIDHW", "NCDHW"))
    y = y + bias.reshape(1, -1, 1, 1, 1)
    mean = jnp.mean(y, axis=(0, 2, 3, 4), keepdims=True)
    var = jnp.mean((y - mean) ** 2, axis=(0, 2, 3, 4), keepdims=True)
    y = jnp.maximum((y - mean) * jax.lax.rsqrt(var + BN_EPS), 0.0)
    if down:
        N, C, D, H, W = y.shape
        y = y.reshape(N, C, D // pk, pk, H // pk, pk, W // pk, pk).mean(axis=(3, 5, 7))
    return y


# ------------------------------------ main ------------------------------------

if __name__ == "__main__":
    key = jax.random.PRNGKey(0)
    k1, k2 = jax.random.split(key)

    N, Cin, Cout, D, H, W = 2, 4, 8, 8, 8, 8

    # Deterministic init mirroring nn.init.kaiming_normal_(nonlinearity='relu'):
    # std = sqrt(2 / fan_in), fan_in = Cin * 27; bias zeroed.
    fan_in = Cin * 27
    weight = jax.random.normal(k1, (Cout, Cin, 3, 3, 3), jnp.float32) * math.sqrt(2.0 / fan_in)
    bias = jnp.zeros((Cout,), jnp.float32)

    x = jax.random.normal(k2, (N, Cin, D, H, W), jnp.float32)

    # down=True path (conv + BN + ReLU + avg-pool)
    out = conv_down_forward(x, weight, bias, down=True, pool_kernel=2)
    out = jax.block_until_ready(out)
    assert out.shape == (N, Cout, D // 2, H // 2, W // 2), out.shape
    ref = _reference(x, weight, bias, down=True, pk=2)
    assert jnp.allclose(out, ref, atol=2e-2, rtol=2e-2), float(jnp.max(jnp.abs(out - ref)))

    # down=False path (conv + BN + ReLU)
    out_nd = conv_down_forward(x, weight, bias, down=False)
    out_nd = jax.block_until_ready(out_nd)
    ref_nd = _reference(x, weight, bias, down=False)
    assert out_nd.shape == ref_nd.shape, out_nd.shape
    assert jnp.allclose(out_nd, ref_nd, atol=2e-2, rtol=2e-2), float(jnp.max(jnp.abs(out_nd - ref_nd)))

    print("KERNEL_OK")
</pallas_src>

<mosaic_0001>
module attributes {stable_mosaic.version = 11 : i64} {
  func.func @_conv_stats_kernel(%arg0: i32, %arg1: memref<256x128xbf16, #tpu.memory_space<vmem>>, %arg2: memref<128x128xbf16, #tpu.memory_space<vmem>>, %arg3: memref<256x128xf32, #tpu.memory_space<vmem>>, %arg4: memref<1x2x128xf32, #tpu.memory_space<vmem>>) attributes {dimension_semantics = [#tpu.dimension_semantics<parallel>], iteration_bounds = array<i64: 4>, scalar_prefetch = 0 : i64, scratch_operands = 0 : i64, tpu.core_type = #tpu.core_type<tc>, window_params = [{transform_indices = @transform_0, window_bounds = array<i64: 256, 128>}, {pipeline_mode = #tpu.pipeline_mode<synchronous>, transform_indices = @transform_1, window_bounds = array<i64: 128, 128>}, {transform_indices = @transform_2, window_bounds = array<i64: 256, 128>}, {transform_indices = @transform_3, window_bounds = array<i64: 1, 2, 128>}]} {
    %c0 = arith.constant 0 : index
    %c0_0 = arith.constant 0 : index
    %0 = vector.load %arg1[%c0, %c0_0] : memref<256x128xbf16, #tpu.memory_space<vmem>>, vector<256x128xbf16>
    %c0_1 = arith.constant 0 : index
    %c0_2 = arith.constant 0 : index
    %1 = vector.load %arg2[%c0_1, %c0_2] : memref<128x128xbf16, #tpu.memory_space<vmem>>, vector<128x128xbf16>
    %cst = arith.constant dense<0.000000e+00> : vector<256x128xf32>
    %2 = tpu.matmul %0, %1, %cst {dimension_numbers = #tpu.dot_dimension_numbers<[1], [0], [0], [1], [0, 0, 1, 1], [], []>} : vector<256x128xbf16>, vector<128x128xbf16>, vector<256x128xf32> -> vector<256x128xf32>
    %c0_3 = arith.constant 0 : index
    %c0_4 = arith.constant 0 : index
    %3 = vector.load %arg3[%c0_3, %c0_4] : memref<256x128xf32, #tpu.memory_space<vmem>>, vector<256x128xf32>
    tpu.vector_store %arg3[%c0_3, %c0_4], %2 {strides = array<i32>} : memref<256x128xf32, #tpu.memory_space<vmem>>, vector<256x128xf32>,
    %cst_5 = arith.constant dense<0.000000e+00> : vector<128xf32>
    %4 = vector.multi_reduction <add>, %2, %cst_5 [0] : vector<256x128xf32> to vector<128xf32>
    %5 = vector.shape_cast %4 : vector<128xf32> to vector<1x128xf32>
    %6 = arith.mulf %2, %2 : vector<256x128xf32>
    %cst_6 = arith.constant dense<0.000000e+00> : vector<128xf32>
    %7 = vector.multi_reduction <add>, %6, %cst_6 [0] : vector<256x128xf32> to vector<128xf32>
    %8 = vector.shape_cast %7 : vector<128xf32> to vector<1x128xf32>
    %9 = tpu.concatenate %5, %8 in 0 : vector<1x128xf32>, vector<1x128xf32> -> vector<2x128xf32>
    %10 = vector.shape_cast %9 : vector<2x128xf32> to vector<1x2x128xf32>
    %c0_7 = arith.constant 0 : index
    %c0_8 = arith.constant 0 : index
    %c0_9 = arith.constant 0 : index
    %11 = vector.load %arg4[%c0_7, %c0_8, %c0_9] : memref<1x2x128xf32, #tpu.memory_space<vmem>>, vector<1x2x128xf32>
    tpu.vector_store %arg4[%c0_7, %c0_8, %c0_9], %10 {strides = array<i32>} : memref<1x2x128xf32, #tpu.memory_space<vmem>>, vector<1x2x128xf32>,
    return
  }
  func.func @transform_0(%arg0: i32) -> (i32, i32) {
    %c0_i32 = arith.constant 0 : i32
    %c0_i32_0 = arith.constant 0 : i32
    return %arg0, %c0_i32 : i32, i32
  }
  func.func @transform_1(%arg0: i32) -> (i32, i32) {
    %c0_i32 = arith.constant 0 : i32
    %c0_i32_0 = arith.constant 0 : i32
    %c0_i32_1 = arith.constant 0 : i32
    return %c0_i32, %c0_i32_0 : i32, i32
  }
  func.func @transform_2(%arg0: i32) -> (i32, i32) {
    %c0_i32 = arith.constant 0 : i32
    %c0_i32_0 = arith.constant 0 : i32
    return %arg0, %c0_i32 : i32, i32
  }
  func.func @transform_3(%arg0: i32) -> (i32, i32, i32) {
    %c0_i32 = arith.constant 0 : i32
    %c0_i32_0 = arith.constant 0 : i32
    %c0_i32_1 = arith.constant 0 : i32
    return %arg0, %c0_i32, %c0_i32_0 : i32, i32, i32
  }
}

</mosaic_0001>

<llo_original>
// kernel: tpu_custom_call.1
$region0: #{tpu_custom_call.1}
  #allocation0 [shape = 'u32[]', space=smem, size = 0x4, offset = 0x4, fixed_abs, tag = 'smem constant byte address 0x4 - core index']
  #allocation1 [shape = 'u32[144,128]{1,0:T(1,128)}', space=vmem, size = 0x12000, scoped, tag = 'internal scratch']
  %s0 = inlined_call_operand.hbm [shape: bf16[1024,128], index: 0, kind: input, shape index: {}]
  %s1 = inlined_call_operand.hbm [shape: bf16[128,128], index: 1, kind: input, shape index: {}]
  %s2 = inlined_call_operand.hbm [shape: f32[1024,128], index: 2, kind: output, shape index: {0}]
  %s3 = inlined_call_operand.hbm [shape: f32[4,2,128], index: 3, kind: output, shape index: {1}]
  %4 = xla_tuple %s2, %s3
  %s5 = sld [smem:[#allocation0]]
  $region57: #{tpu_custom_call.1} parent=0
    _
  %s7 = ssub.s32 1, %s5
  %s8 = scalar_select 0, %s7, %s5
  $region1: #{tpu_custom_call.1} parent=0
    #allocation2 [shape = 'u8[131072]{0}', space=vmem, size = 0x20000, scoped, tag = 'input window, operand 0']
    #allocation3 [shape = 's32[2]{0}', space=sflag, size = 0x8, scoped, tag = 'scoped memory for tpu_custom_call.1']
    #allocation4 [shape = 's32[2]{0}', space=sflag, size = 0x8, scoped, tag = 'scoped memory for tpu_custom_call.1']
    #allocation5 [shape = 'u8[32768]{0}', space=vmem, size = 0x8000, scoped, tag = 'input window, operand 1, single buffered']
    #allocation6 [shape = 's32[1]{0}', space=sflag, size = 0x4, scoped, tag = 'scoped memory for tpu_custom_call.1']
    #allocation7 [shape = 'u8[262144]{0}', space=vmem, size = 0x40000, scoped, tag = 'output window, operand 0']
    #allocation8 [shape = 'u8[2048]{0}', space=vmem, size = 0x800, scoped, tag = 'output window, operand 1']
    #allocation9 [shape = 's32[2]{0}', space=sflag, size = 0x8, scoped, tag = 'scoped memory for tpu_custom_call.1']
    %9 = vsyncpa [#allocation3], 0
    %s10 = scalar_lea.sflag [#allocation3], 1
    %11 = vsyncpa %s10, 0
    %12 = vsyncpa [#allocation6], 0
    %13 = vsyncpa [#allocation4], 0
    %s14 = scalar_lea.sflag [#allocation4], 1
    %15 = vsyncpa %s14, 0
    %16 = vsyncpa [#allocation9], 0
    %s17 = scalar_lea.sflag [#allocation9], 1
    %18 = vsyncpa %s17, 0
    loop: start=0, step=1, limit=6
    $region2: #{tpu_custom_call.1} parent=1 // loop_pre_header
      _
    $region3: #{tpu_custom_call.1} parent=1 // loop_header
      %s20 = sphi 0, %s24
      %p21 = scmp.ge.s32.totalorder %s20, 6
      %s30 = sphi 0, %s32
      %s33 = sphi 0, %s30
      %s34 = sphi 0, %s33
      %s50 = sphi 0, %s34
      %s54 = sphi 0, %s54
      %s56 = sphi 0, %s54
      %s57 = sphi 0, %s56
      %s71 = sphi 0, %s57
      %s77 = sphi 0, %s79
      %s80 = sphi 0, %s77
      %s81 = sphi 0, %s80
      %s97 = sphi 0, %s81
      %s103 = sphi 0, %s105
      %s106 = sphi 0, %s103
      %s107 = sphi 0, %s106
      %s123 = sphi 0, %s107
    $region4: #{tpu_custom_call.1} parent=1 // loop_header_branch
      %23 = sbr.rel (%p21) target = $region8
    $region5: #{tpu_custom_call.1} parent=1 // loop_body
      %s25 = ssub.s32 %s20, 1
      %s26 = ssub.s32 %s20, 2
      %s27 = sadd.s32 %s20, 1
      %s28 = ssub.s32 %s20, %s27
      %p29 = scmp.eq.s32.totalorder %s28, 0
      %s31 = sadd.s32 %s30, 1
      %s32 = scalar_select %p29, %s30, %s31
      %p35 = pneg %p29
      %p36 = scmp.eq.s32.totalorder %s20, 3
      %p37 = por %p35, %p36
      %p38 = scmp.ne.s32.totalorder %s30, %s33
      %p39 = scmp.eq.s32.totalorder %s20, 0
      %p40 = por %p38, %p39
      %p41 = scmp.ne.s32.totalorder %s30, %s33
      %p42 = scmp.eq.s32.totalorder %s25, 3
      %p43 = por %p41, %p42
      %p44 = scmp.ne.s32.totalorder %s33, %s34
      %p45 = scmp.eq.s32.totalorder %s25, 0
      %p46 = por %p44, %p45
      %p47 = scmp.ne.s32.totalorder %s33, %s34
      %p48 = scmp.eq.s32.totalorder %s26, 3
      %p49 = por %p47, %p48
      %p51 = scmp.ne.s32.totalorder %s34, %s50
      %p52 = scmp.eq.s32.totalorder %s26, 0
      %p53 = por %p51, %p52
      %s55 = sadd.s32 %s54, 1
      %p58 = scmp.eq.s32.totalorder %s20, 3
      %p59 = scmp.ne.s32.totalorder %s54, %s56
      %p60 = scmp.eq.s32.totalorder %s20, 0
      %p61 = por %p59, %p60
      %p62 = scmp.ne.s32.totalorder %s54, %s56
      %p63 = scmp.eq.s32.totalorder %s25, 3
      %p64 = por %p62, %p63
      %p65 = scmp.ne.s32.totalorder %s56, %s57
      %p66 = scmp.eq.s32.totalorder %s25, 0
      %p67 = por %p65, %p66
      %p68 = scmp.ne.s32.totalorder %s56, %s57
      %p69 = scmp.eq.s32.totalorder %s26, 3
      %p70 = por %p68, %p69
      %p72 = scmp.ne.s32.totalorder %s57, %s71
      %p73 = scmp.eq.s32.totalorder %s26, 0
      %p74 = por %p72, %p73
      %s75 = ssub.s32 %s20, %s27
      %p76 = scmp.eq.s32.totalorder %s75, 0
      %s78 = sadd.s32 %s77, 1
      %s79 = scalar_select %p76, %s77, %s78
      %p82 = pneg %p76
      %p83 = scmp.eq.s32.totalorder %s20, 3
      %p84 = por %p82, %p83
      %p85 = scmp.ne.s32.totalorder %s77, %s80
      %p86 = scmp.eq.s32.totalorder %s20, 0
      %p87 = por %p85, %p86
      %p88 = scmp.ne.s32.totalorder %s77, %s80
      %p89 = scmp.eq.s32.totalorder %s25, 3
      %p90 = por %p88, %p89
      %p91 = scmp.ne.s32.totalorder %s80, %s81
      %p92 = scmp.eq.s32.totalorder %s25, 0
      %p93 = por %p91, %p92
      %p94 = scmp.ne.s32.totalorder %s80, %s81
      %p95 = scmp.eq.s32.totalorder %s26, 3
      %p96 = por %p94, %p95
      %p98 = scmp.ne.s32.totalorder %s81, %s97
      %p99 = scmp.eq.s32.totalorder %s26, 0
      %p100 = por %p98, %p99
      %s101 = ssub.s32 %s20, %s27
      %p102 = scmp.eq.s32.totalorder %s101, 0
      %s104 = sadd.s32 %s103, 1
      %s105 = scalar_select %p102, %s103, %s104
      %p108 = pneg %p102
      %p109 = scmp.eq.s32.totalorder %s20, 3
      %p110 = por %p108, %p109
      %p111 = scmp.ne.s32.totalorder %s103, %s106
      %p112 = scmp.eq.s32.totalorder %s20, 0
      %p113 = por %p111, %p112
      %p114 = scmp.ne.s32.totalorder %s103, %s106
      %p115 = scmp.eq.s32.totalorder %s25, 3
      %p116 = por %p114, %p115
      %p117 = scmp.ne.s32.totalorder %s106, %s107
      %p118 = scmp.eq.s32.totalorder %s25, 0
      %p119 = por %p117, %p118
      %p120 = scmp.ne.s32.totalorder %s106, %s107
      %p121 = scmp.eq.s32.totalorder %s26, 3
      %p122 = por %p120, %p121
      %p124 = scmp.ne.s32.totalorder %s107, %s123
      %p125 = scmp.eq.s32.totalorder %s26, 0
      %p126 = por %p124, %p125
      %p127 = scmp.le.s32.totalorder 1, %s20
      %p128 = scmp.lt.s32.totalorder %s20, 5
      %p129 = pnand %p127, %p128
      %p130 = pneg %p129
      // Predicated region
      $region9: #{tpu_custom_call.1} parent=5 // pred_check
        _
      $region10: #{tpu_custom_call.1} parent=5 // pred_check_branch
        %132 = sbr.rel (%p129) target = $region12
      $region11: #{tpu_custom_call.1} parent=5 // pred_region
        %s133 = ssub.s32 %s20, 1
        // Predicated region
        $region13: #{tpu_custom_call.1} parent=11 // pred_check
          %p134 = pneg %p67
        $region14: #{tpu_custom_call.1} parent=11 // pred_check_branch
          %136 = sbr.rel (%p134) target = $region16
        $region15: #{tpu_custom_call.1} parent=11 // pred_region
          %s138 = ssub.s32 1024, 1024
          %139 = vsyncadd [#allocation6], %s138
          %s140 = sshll.u32 [#allocation5], 4
          %s141 = int_to_ptr.vmem [resolvable:$true] %s140
          %146 = dma.hbm_to_vmem [thread:$0]  %s1, 1024, %s141, [#allocation6], 64, 64, 4
        $region16: #{tpu_custom_call.1} parent=11 // pred_fallthru
          _
      $region12: #{tpu_custom_call.1} parent=5 // pred_fallthru
        _
      %p147 = scmp.lt.s32.totalorder %s20, 4
      // Predicated region
      $region17: #{tpu_custom_call.1} parent=5 // pred_check
        %p148 = pneg %p147
      $region18: #{tpu_custom_call.1} parent=5 // pred_check_branch
        %150 = sbr.rel (%p148) target = $region20
      $region19: #{tpu_custom_call.1} parent=5 // pred_region
        // Predicated region
        $region21: #{tpu_custom_call.1} parent=19 // pred_check
          %p151 = pneg %p40
        $region22: #{tpu_custom_call.1} parent=19 // pred_check_branch
          %153 = sbr.rel (%p151) target = $region24
        $region23: #{tpu_custom_call.1} parent=19 // pred_region
          %s154 = sand.u32 %s30, 1
          %s155 = scalar_lea.sflag [#allocation3], %s154
          %s156 = sand.u32 %s30, 1
          %s157 = smul.addr %s156, 128
          %s158 = scalar_lea.vmem [#allocation2], %s157
          %s159 = smul.u32 32, %s20
          %s161 = ssub.s32 2048, 2048
          %162 = vsyncadd %s155, %s161
          %s163 = smul.addr %s159, 64
          %s164 = scalar_lea.hbm %s0, %s163
          %s165 = sshll.u32 %s158, 4
          %s166 = int_to_ptr.vmem [resolvable:$true] %s165
          %171 = dma.hbm_to_vmem [thread:$0]  %s164, 2048, %s166, %s155, 64, 64, 4
        $region24: #{tpu_custom_call.1} parent=19 // pred_fallthru
          _
      $region20: #{tpu_custom_call.1} parent=5 // pred_fallthru
        _
      %p172 = scmp.le.s32.totalorder 1, %s20
      %p173 = scmp.lt.s32.totalorder %s20, 5
      %p174 = pnand %p172, %p173
      %p175 = pneg %p174
      // Predicated region
      $region25: #{tpu_custom_call.1} parent=5 // pred_check
        _
      $region26: #{tpu_custom_call.1} parent=5 // pred_check_branch
        %177 = sbr.rel (%p174) target = $region28
      $region27: #{tpu_custom_call.1} parent=5 // pred_region
        %s178 = ssub.s32 %s20, 1
        %s179 = sand.u32 %s33, 1
        %s180 = scalar_lea.sflag [#allocation3], %s179
        %s181 = sand.u32 %s33, 1
        %s182 = smul.addr %s181, 128
        %s183 = scalar_lea.vmem [#allocation2], %s182
        // Predicated region
        $region29: #{tpu_custom_call.1} parent=27 // pred_check
          %p184 = pneg %p46
        $region30: #{tpu_custom_call.1} parent=27 // pred_check_branch
          %186 = sbr.rel (%p184) target = $region32
        $region31: #{tpu_custom_call.1} parent=27 // pred_region
          %187 = dma.done %s180, 2048
        $region32: #{tpu_custom_call.1} parent=27 // pred_fallthru
          _
        // Predicated region
        $region33: #{tpu_custom_call.1} parent=27 // pred_check
          %p188 = pneg %p67
        $region34: #{tpu_custom_call.1} parent=27 // pred_check_branch
          %190 = sbr.rel (%p188) target = $region36
        $region35: #{tpu_custom_call.1} parent=27 // pred_region
          %191 = dma.done [#allocation6], 1024
        $region36: #{tpu_custom_call.1} parent=27 // pred_fallthru
          _
        %s192 = sand.u32 %s33, 1
        %s193 = scalar_lea.sflag [#allocation3], %s192
        %s194 = sand.u32 %s33, 1
        %s195 = smul.addr %s194, 128
        %s196 = scalar_lea.vmem [#allocation2], %s195
        %p197 = pneg %p46
        %p198 = pneg %p43
        %p199 = pneg %p67
        %p200 = pneg %p64
        %p201 = pneg %p93
        %p202 = pneg %p90
        %s203 = sand.u32 %s80, 1
        %s204 = scalar_lea.sflag [#allocation4], %s203
        %s205 = sand.u32 %s80, 1
        %s206 = smul.addr %s205, 256
        %s207 = scalar_lea.vmem [#allocation7], %s206
        %p208 = pneg %p119
        %p209 = pneg %p116
        %s210 = sand.u32 %s106, 1
        %s211 = scalar_lea.sflag [#allocation9], %s210
        %s212 = sand.u32 %s106, 1
        %s213 = smul.addr %s212, 2
        %s214 = scalar_lea.vmem [#allocation8], %s213
        %s215 = smul.u32 32, %s25
        %s216 = smul.u32 32, %s25
        %v218 = vld [vmem:[%s183] sm:$0xf]
        %v219 = vld [vmem:[%s183 + $0x4] sm:$0xf]
        %v220 = vld [vmem:[%s183 + $0x8] sm:$0xf]
        %v221 = vld [vmem:[%s183 + $0xc] sm:$0xf]
        %v222 = vld [vmem:[%s183 + $0x10] sm:$0xf]
        %v223 = vld [vmem:[%s183 + $0x14] sm:$0xf]
        %v224 = vld [vmem:[%s183 + $0x18] sm:$0xf]
        %v225 = vld [vmem:[%s183 + $0x1c] sm:$0xf]
        %v226 = vld [vmem:[%s183 + $0x20] sm:$0xf]
        %v227 = vld [vmem:[%s183 + $0x24] sm:$0xf]
        %v228 = vld [vmem:[%s183 + $0x28] sm:$0xf]
        %v229 = vld [vmem:[%s183 + $0x2c] sm:$0xf]
        %v230 = vld [vmem:[%s183 + $0x30] sm:$0xf]
        %v231 = vld [vmem:[%s183 + $0x34] sm:$0xf]
        %v232 = vld [vmem:[%s183 + $0x38] sm:$0xf]
        %v233 = vld [vmem:[%s183 + $0x3c] sm:$0xf]
        %v234 = vld [vmem:[%s183 + $0x40] sm:$0xf]
        %v235 = vld [vmem:[%s183 + $0x44] sm:$0xf]
        %v236 = vld [vmem:[%s183 + $0x48] sm:$0xf]
        %v237 = vld [vmem:[%s183 + $0x4c] sm:$0xf]
        %v238 = vld [vmem:[%s183 + $0x50] sm:$0xf]
        %v239 = vld [vmem:[%s183 + $0x54] sm:$0xf]
        %v240 = vld [vmem:[%s183 + $0x58] sm:$0xf]
        %v241 = vld [vmem:[%s183 + $0x5c] sm:$0xf]
        %v242 = vld [vmem:[%s183 + $0x60] sm:$0xf]
        %v243 = vld [vmem:[%s183 + $0x64] sm:$0xf]
        %v244 = vld [vmem:[%s183 + $0x68] sm:$0xf]
        %v245 = vld [vmem:[%s183 + $0x6c] sm:$0xf]
        %v246 = vld [vmem:[%s183 + $0x70] sm:$0xf]
        %v247 = vld [vmem:[%s183 + $0x74] sm:$0xf]
        %v248 = vld [vmem:[%s183 + $0x78] sm:$0xf]
        %v249 = vld [vmem:[%s183 + $0x7c] sm:$0xf]
        %v250 = vld [vmem:[#allocation5] sm:$0xf]
        %v251 = vld [vmem:[#allocation5 + $0x4] sm:$0xf]
        %v252 = vld [vmem:[#allocation5 + $0x8] sm:$0xf]
        %v253 = vld [vmem:[#allocation5 + $0xc] sm:$0xf]
        %v254 = vld [vmem:[#allocation5 + $0x10] sm:$0xf]
        %v255 = vld [vmem:[#allocation5 + $0x14] sm:$0xf]
        %v256 = vld [vmem:[#allocation5 + $0x18] sm:$0xf]
        %v257 = vld [vmem:[#allocation5 + $0x1c] sm:$0xf]
        %v258 = vld [vmem:[#allocation5 + $0x20] sm:$0xf]
        %v259 = vld [vmem:[#allocation5 + $0x24] sm:$0xf]
        %v260 = vld [vmem:[#allocation5 + $0x28] sm:$0xf]
        %v261 = vld [vmem:[#allocation5 + $0x2c] sm:$0xf]
        %v262 = vld [vmem:[#allocation5 + $0x30] sm:$0xf]
        %v263 = vld [vmem:[#allocation5 + $0x34] sm:$0xf]
        %v264 = vld [vmem:[#allocation5 + $0x38] sm:$0xf]
        %v265 = vld [vmem:[#allocation5 + $0x3c] sm:$0xf]
        %v298 = vunpack.c.l.b16 %v218
        %v299 = vunpack.c.l.b16 %v219
        %v300 = vunpack.c.l.b16 %v220
        %v301 = vunpack.c.l.b16 %v221
        %v302 = vunpack.c.l.b16 %v222
        %v303 = vunpack.c.l.b16 %v223
        %v304 = vunpack.c.l.b16 %v224
        %v305 = vunpack.c.l.b16 %v225
        %v306 = vunpack.c.l.b16 %v226
        %v307 = vunpack.c.l.b16 %v227
        %v308 = vunpack.c.l.b16 %v228
        %v309 = vunpack.c.l.b16 %v229
        %v310 = vunpack.c.l.b16 %v230
        %v311 = vunpack.c.l.b16 %v231
        %v312 = vunpack.c.l.b16 %v232
        %v313 = vunpack.c.l.b16 %v233
        %v314 = vunpack.c.l.b16 %v234
        %v315 = vunpack.c.l.b16 %v235
        %v316 = vunpack.c.l.b16 %v236
        %v317 = vunpack.c.l.b16 %v237
        %v318 = vunpack.c.l.b16 %v238
        %v319 = vunpack.c.l.b16 %v239
        %v320 = vunpack.c.l.b16 %v240
        %v321 = vunpack.c.l.b16 %v241
        %v322 = vunpack.c.l.b16 %v242
        %v323 = vunpack.c.l.b16 %v243
        %v324 = vunpack.c.l.b16 %v244
        %v325 = vunpack.c.l.b16 %v245
        %v326 = vunpack.c.l.b16 %v246
        %v327 = vunpack.c.l.b16 %v247
        %v328 = vunpack.c.l.b16 %v248
        %v329 = vunpack.c.l.b16 %v249
        %v330 = vpack.c.b16 %v299, %v298
        %v331 = vpack.c.b16 %v301, %v300
        %v332 = vpack.c.b16 %v303, %v302
        %v333 = vpack.c.b16 %v305, %v304
        %v334 = vpack.c.b16 %v307, %v306
        %v335 = vpack.c.b16 %v309, %v308
        %v336 = vpack.c.b16 %v311, %v310
        %v337 = vpack.c.b16 %v313, %v312
        %v338 = vpack.c.b16 %v315, %v314
        %v339 = vpack.c.b16 %v317, %v316
        %v340 = vpack.c.b16 %v319, %v318
        %v341 = vpack.c.b16 %v321, %v320
        %v342 = vpack.c.b16 %v323, %v322
        %v343 = vpack.c.b16 %v325, %v324
        %v344 = vpack.c.b16 %v327, %v326
        %v345 = vpack.c.b16 %v329, %v328
        %v378 = vunpack.c.l.b16 %v250
        %v379 = vunpack.c.l.b16 %v251
        %v380 = vunpack.c.l.b16 %v252
        %v381 = vunpack.c.l.b16 %v253
        %v382 = vunpack.c.l.b16 %v254
        %v383 = vunpack.c.l.b16 %v255
        %v384 = vunpack.c.l.b16 %v256
        %v385 = vunpack.c.l.b16 %v257
        %v386 = vunpack.c.l.b16 %v258
        %v387 = vunpack.c.l.b16 %v259
        %v388 = vunpack.c.l.b16 %v260
        %v389 = vunpack.c.l.b16 %v261
        %v390 = vunpack.c.l.b16 %v262
        %v391 = vunpack.c.l.b16 %v263
        %v392 = vunpack.c.l.b16 %v264
        %v393 = vunpack.c.l.b16 %v265
        %v394 = vpack.c.b16 %v379, %v378
        %v395 = vpack.c.b16 %v381, %v380
        %v396 = vpack.c.b16 %v383, %v382
        %v397 = vpack.c.b16 %v385, %v384
        %v398 = vpack.c.b16 %v387, %v386
        %v399 = vpack.c.b16 %v389, %v388
        %v400 = vpack.c.b16 %v391, %v390
        %v401 = vpack.c.b16 %v393, %v392
        %410 = vmatprep.subr.bf16.mxu0 0
        %411 = vmatpush1.bf16.msra.mxu0 %v394
        %412 = vmatprep.subr.bf16.mxu0 0
        %413 = vmatpush1.bf16.msra.mxu0 %v395
        %414 = vmatprep.subr.bf16.mxu0 0
        %415 = vmatpush1.bf16.msra.mxu0 %v396
        %416 = vmatprep.subr.bf16.mxu0 0
        %417 = vmatpush1.bf16.msra.mxu0 %v397
        %418 = vmatprep.subr.bf16.mxu0 0
        %419 = vmatpush1.bf16.msra.mxu0 %v398
        %420 = vmatprep.subr.bf16.mxu0 0
        %421 = vmatpush1.bf16.msra.mxu0 %v399
        %422 = vmatprep.subr.bf16.mxu0 0
        %423 = vmatpush1.bf16.msra.mxu0 %v400
        %424 = vmatprep.subr.bf16.mxu0 0
        %425 = vmatpush1.bf16.msra.mxu0 %v401
        %426 = vmatprep.subr.bf16.mxu0 0
        %427 = vmatpush1.bf16.msra.mxu0 0
        %428 = vmatprep.subr.bf16.mxu0 0
        %429 = vmatpush1.bf16.msra.mxu0 0
        %430 = vmatprep.subr.bf16.mxu0 0
        %431 = vmatpush1.bf16.msra.mxu0 0
        %432 = vmatprep.subr.bf16.mxu0 0
        %433 = vmatpush1.bf16.msra.mxu0 0
        %434 = vmatprep.subr.bf16.mxu0 0
        %435 = vmatpush1.bf16.msra.mxu0 0
        %436 = vmatprep.subr.bf16.mxu0 0
        %437 = vmatpush1.bf16.msra.mxu0 0
        %438 = vmatprep.subr.bf16.mxu0 0
        %439 = vmatpush1.bf16.msra.mxu0 0
        %440 = vmatprep.subr.bf16.mxu0 0
        %441 = vmatpush1.bf16.msra.mxu0 0
        %442 = vmatprep.mubr.bf16.mxu0 0
        %443 = vmatmul.mubr.bf16.gmra.mrb[0].mxu0 %v330
        %v444 = vpop.f32.mrb[0].mxu0
        %v445 = vadd.f32 0.0, %v444
        %v446 = vpop.f32.mrb[0].mxu0
        %v447 = vpop.f32.mrb[0].mxu0
        %v448 = vadd.f32 0.0, %v447
        %v449 = vpop.f32.mrb[0].mxu0
        %450 = vmatprep.mubr.bf16.mxu0 0
        %451 = vmatmul.mubr.bf16.gmra.mrb[0].mxu0 %v331
        %v452 = vpop.f32.mrb[0].mxu0
        %v453 = vadd.f32 0.0, %v452
        %v454 = vpop.f32.mrb[0].mxu0
        %v455 = vpop.f32.mrb[0].mxu0
        %v456 = vadd.f32 0.0, %v455
        %v457 = vpop.f32.mrb[0].mxu0
        %458 = vmatprep.mubr.bf16.mxu0 0
        %459 = vmatmul.mubr.bf16.gmra.mrb[0].mxu0 %v332
        %v460 = vpop.f32.mrb[0].mxu0
        %v461 = vadd.f32 0.0, %v460
        %v462 = vpop.f32.mrb[0].mxu0
        %v463 = vpop.f32.mrb[0].mxu0
        %v464 = vadd.f32 0.0, %v463
        %v465 = vpop.f32.mrb[0].mxu0
        %466 = vmatprep.mubr.bf16.mxu0 0
        %467 = vmatmul.mubr.bf16.gmra.mrb[0].mxu0 %v333
        %v468 = vpop.f32.mrb[0].mxu0
        %v469 = vadd.f32 0.0, %v468
        %v470 = vpop.f32.mrb[0].mxu0
        %v471 = vpop.f32.mrb[0].mxu0
        %v472 = vadd.f32 0.0, %v471
        %v473 = vpop.f32.mrb[0].mxu0
        %474 = vmatprep.mubr.bf16.mxu0 0
        %475 = vmatmul.mubr.bf16.gmra.mrb[0].mxu0 %v334
        %v476 = vpop.f32.mrb[0].mxu0
        %v477 = vadd.f32 0.0, %v476
        %v478 = vpop.f32.mrb[0].mxu0
        %v479 = vpop.f32.mrb[0].mxu0
        %v480 = vadd.f32 0.0, %v479
        %v481 = vpop.f32.mrb[0].mxu0
        %482 = vmatprep.mubr.bf16.mxu0 0
        %483 = vmatmul.mubr.bf16.gmra.mrb[0].mxu0 %v335
        %v484 = vpop.f32.mrb[0].mxu0
        %v485 = vadd.f32 0.0, %v484
        %v486 = vpop.f32.mrb[0].mxu0
        %v487 = vpop.f32.mrb[0].mxu0
        %v488 = vadd.f32 0.0, %v487
        %v489 = vpop.f32.mrb[0].mxu0
        %490 = vmatprep.mubr.bf16.mxu0 0
        %491 = vmatmul.mubr.bf16.gmra.mrb[0].mxu0 %v336
        %v492 = vpop.f32.mrb[0].mxu0
        %v493 = vadd.f32 0.0, %v492
        %v494 = vpop.f32.mrb[0].mxu0
        %v495 = vpop.f32.mrb[0].mxu0
        %v496 = vadd.f32 0.0, %v495
        %v497 = vpop.f32.mrb[0].mxu0
        %498 = vmatprep.mubr.bf16.mxu0 0
        %499 = vmatmul.mubr.bf16.gmra.mrb[0].mxu0 %v337
        %v500 = vpop.f32.mrb[0].mxu0
        %v501 = vadd.f32 0.0, %v500
        %v502 = vpop.f32.mrb[0].mxu0
        %v503 = vpop.f32.mrb[0].mxu0
        %v504 = vadd.f32 0.0, %v503
        %v505 = vpop.f32.mrb[0].mxu0
        %506 = vmatprep.mubr.bf16.mxu0 0
        %507 = vmatmul.mubr.bf16.gmra.mrb[0].mxu0 %v338
        %v508 = vpop.f32.mrb[0].mxu0
        %v509 = vadd.f32 0.0, %v508
        %v510 = vpop.f32.mrb[0].mxu0
        %v511 = vpop.f32.mrb[0].mxu0
        %v512 = vadd.f32 0.0, %v511
        %v513 = vpop.f32.mrb[0].mxu0
        %514 = vmatprep.mubr.bf16.mxu0 0
        %515 = vmatmul.mubr.bf16.gmra.mrb[0].mxu0 %v339
        %v516 = vpop.f32.mrb[0].mxu0
        %v517 = vadd.f32 0.0, %v516
        %v518 = vpop.f32.mrb[0].mxu0
        %v519 = vpop.f32.mrb[0].mxu0
        %v520 = vadd.f32 0.0, %v519
        %v521 = vpop.f32.mrb[0].mxu0
        %522 = vmatprep.mubr.bf16.mxu0 0
        %523 = vmatmul.mubr.bf16.gmra.mrb[0].mxu0 %v340
        %v524 = vpop.f32.mrb[0].mxu0
        %v525 = vadd.f32 0.0, %v524
        %v526 = vpop.f32.mrb[0].mxu0
        %v527 = vpop.f32.mrb[0].mxu0
        %v528 = vadd.f32 0.0, %v527
        %v529 = vpop.f32.mrb[0].mxu0
        %530 = vmatprep.mubr.bf16.mxu0 0
        %531 = vmatmul.mubr.bf16.gmra.mrb[0].mxu0 %v341
        %v532 = vpop.f32.mrb[0].mxu0
        %v533 = vadd.f32 0.0, %v532
        %v534 = vpop.f32.mrb[0].mxu0
        %v535 = vpop.f32.mrb[0].mxu0
        %v536 = vadd.f32 0.0, %v535
        %v537 = vpop.f32.mrb[0].mxu0
        %538 = vmatprep.mubr.bf16.mxu0 0
        %539 = vmatmul.mubr.bf16.gmra.mrb[0].mxu0 %v342
        %v540 = vpop.f32.mrb[0].mxu0
        %v541 = vadd.f32 0.0, %v540
        %v542 = vpop.f32.mrb[0].mxu0
        %v543 = vpop.f32.mrb[0].mxu0
        %v544 = vadd.f32 0.0, %v543
        %v545 = vpop.f32.mrb[0].mxu0
        %546 = vmatprep.mubr.bf16.mxu0 0
        %547 = vmatmul.mubr.bf16.gmra.mrb[0].mxu0 %v343
        %v548 = vpop.f32.mrb[0].mxu0
        %v549 = vadd.f32 0.0, %v548
        %v550 = vpop.f32.mrb[0].mxu0
        %v551 = vpop.f32.mrb[0].mxu0
        %v552 = vadd.f32 0.0, %v551
        %v553 = vpop.f32.mrb[0].mxu0
        %554 = vmatprep.mubr.bf16.mxu0 0
        %555 = vmatmul.mubr.bf16.gmra.mrb[0].mxu0 %v344
        %v556 = vpop.f32.mrb[0].mxu0
        %v557 = vadd.f32 0.0, %v556
        %v558 = vpop.f32.mrb[0].mxu0
        %v559 = vpop.f32.mrb[0].mxu0
        %v560 = vadd.f32 0.0, %v559
        %v561 = vpop.f32.mrb[0].mxu0
        %562 = vmatprep.mubr.bf16.mxu0 0
        %563 = vmatmul.mubr.bf16.gmra.mrb[0].mxu0 %v345
        %v564 = vpop.f32.mrb[0].mxu0
        %v565 = vadd.f32 0.0, %v564
        %v566 = vpop.f32.mrb[0].mxu0
        %v567 = vpop.f32.mrb[0].mxu0
        %v568 = vadd.f32 0.0, %v567
        %v569 = vpop.f32.mrb[0].mxu0
        %570 = vdwg.mxu0
        %571 = vst [vmem:[%s207] sm:$0xff] %v445
        %572 = vst [vmem:[%s207 + $0x8] sm:$0xff] %v448
        %573 = vst [vmem:[%s207 + $0x10] sm:$0xff] %v453
        %574 = vst [vmem:[%s207 + $0x18] sm:$0xff] %v456
        %575 = vst [vmem:[%s207 + $0x20] sm:$0xff] %v461
        %576 = vst [vmem:[%s207 + $0x28] sm:$0xff] %v464
        %577 = vst [vmem:[%s207 + $0x30] sm:$0xff] %v469
        %578 = vst [vmem:[%s207 + $0x38] sm:$0xff] %v472
        %579 = vst [vmem:[%s207 + $0x40] sm:$0xff] %v477
        %580 = vst [vmem:[%s207 + $0x48] sm:$0xff] %v480
        %581 = vst [vmem:[%s207 + $0x50] sm:$0xff] %v485
        %582 = vst [vmem:[%s207 + $0x58] sm:$0xff] %v488
        %583 = vst [vmem:[%s207 + $0x60] sm:$0xff] %v493
        %584 = vst [vmem:[%s207 + $0x68] sm:$0xff] %v496
        %585 = vst [vmem:[%s207 + $0x70] sm:$0xff] %v501
        %586 = vst [vmem:[%s207 + $0x78] sm:$0xff] %v504
        %587 = vst [vmem:[%s207 + $0x80] sm:$0xff] %v509
        %588 = vst [vmem:[%s207 + $0x88] sm:$0xff] %v512
        %589 = vst [vmem:[%s207 + $0x90] sm:$0xff] %v517
        %590 = vst [vmem:[%s207 + $0x98] sm:$0xff] %v520
        %591 = vst [vmem:[%s207 + $0xa0] sm:$0xff] %v525
        %592 = vst [vmem:[%s207 + $0xa8] sm:$0xff] %v528
        %593 = vst [vmem:[%s207 + $0xb0] sm:$0xff] %v533
        %594 = vst [vmem:[%s207 + $0xb8] sm:$0xff] %v536
        %595 = vst [vmem:[%s207 + $0xc0] sm:$0xff] %v541
        %596 = vst [vmem:[%s207 + $0xc8] sm:$0xff] %v544
        %597 = vst [vmem:[%s207 + $0xd0] sm:$0xff] %v549
        %598 = vst [vmem:[%s207 + $0xd8] sm:$0xff] %v552
        %599 = vst [vmem:[%s207 + $0xe0] sm:$0xff] %v557
        %600 = vst [vmem:[%s207 + $0xe8] sm:$0xff] %v560
        %601 = vst [vmem:[%s207 + $0xf0] sm:$0xff] %v565
        %602 = vst [vmem:[%s207 + $0xf8] sm:$0xff] %v568
        %v603 = vadd.f32 %v445, %v448
        %v604 = vadd.f32 %v603, %v453
        %v605 = vadd.f32 %v604, %v456
        %v606 = vadd.f32 %v605, %v461
        %v607 = vadd.f32 %v606, %v464
        %v608 = vadd.f32 %v607, %v469
        %v609 = vadd.f32 %v608, %v472
        %v610 = vadd.f32 %v609, %v477
        %v611 = vadd.f32 %v610, %v480
        %v612 = vadd.f32 %v611, %v485
        %v613 = vadd.f32 %v612, %v488
        %v614 = vadd.f32 %v613, %v493
        %v615 = vadd.f32 %v614, %v496
        %v616 = vadd.f32 %v615, %v501
        %v617 = vadd.f32 %v616, %v504
        %v618 = vadd.f32 %v617, %v509
        %v619 = vadd.f32 %v618, %v512
        %v620 = vadd.f32 %v619, %v517
        %v621 = vadd.f32 %v620, %v520
        %v622 = vadd.f32 %v621, %v525
        %v623 = vadd.f32 %v622, %v528
        %v624 = vadd.f32 %v623, %v533
        %v625 = vadd.f32 %v624, %v536
        %v626 = vadd.f32 %v625, %v541
        %v627 = vadd.f32 %v626, %v544
        %v628 = vadd.f32 %v627, %v549
        %v629 = vadd.f32 %v628, %v552
        %v630 = vadd.f32 %v629, %v557
        %v631 = vadd.f32 %v630, %v560
        %v632 = vadd.f32 %v631, %v565
        %v633 = vadd.f32 %v632, %v568
        %v634 = vrot.slane %v633, 4
        %v635 = vadd.f32 %v633, %v634
        %v636 = vrot.slane %v635, 2
        %v637 = vadd.f32 %v635, %v636
        %v638 = vrot.slane %v637, 1
        %v639 = vadd.f32 %v637, %v638
        %v640 = vmul.f32 %v445, %v445
        %v641 = vmul.f32 %v448, %v448
        %v642 = vmul.f32 %v453, %v453
        %v643 = vmul.f32 %v456, %v456
        %v644 = vmul.f32 %v461, %v461
        %v645 = vmul.f32 %v464, %v464
        %v646 = vmul.f32 %v469, %v469
        %v647 = vmul.f32 %v472, %v472
        %v648 = vmul.f32 %v477, %v477
        %v649 = vmul.f32 %v480, %v480
        %v650 = vmul.f32 %v485, %v485
        %v651 = vmul.f32 %v488, %v488
        %v652 = vmul.f32 %v493, %v493
        %v653 = vmul.f32 %v496, %v496
        %v654 = vmul.f32 %v501, %v501
        %v655 = vmul.f32 %v504, %v504
        %v656 = vmul.f32 %v509, %v509
        %v657 = vmul.f32 %v512, %v512
        %v658 = vmul.f32 %v517, %v517
        %v659 = vmul.f32 %v520, %v520
        %v660 = vmul.f32 %v525, %v525
        %v661 = vmul.f32 %v528, %v528
        %v662 = vmul.f32 %v533, %v533
        %v663 = vmul.f32 %v536, %v536
        %v664 = vmul.f32 %v541, %v541
        %v665 = vmul.f32 %v544, %v544
        %v666 = vmul.f32 %v549, %v549
        %v667 = vmul.f32 %v552, %v552
        %v668 = vmul.f32 %v557, %v557
        %v669 = vmul.f32 %v560, %v560
        %v670 = vmul.f32 %v565, %v565
        %v671 = vmul.f32 %v568, %v568
        %v672 = vadd.f32 %v640, %v641
        %v673 = vadd.f32 %v672, %v642
        %v674 = vadd.f32 %v673, %v643
        %v675 = vadd.f32 %v674, %v644
        %v676 = vadd.f32 %v675, %v645
        %v677 = vadd.f32 %v676, %v646
        %v678 = vadd.f32 %v677, %v647
        %v679 = vadd.f32 %v678, %v648
        %v680 = vadd.f32 %v679, %v649
        %v681 = vadd.f32 %v680, %v650
        %v682 = vadd.f32 %v681, %v651
        %v683 = vadd.f32 %v682, %v652
        %v684 = vadd.f32 %v683, %v653
        %v685 = vadd.f32 %v684, %v654
        %v686 = vadd.f32 %v685, %v655
        %v687 = vadd.f32 %v686, %v656
        %v688 = vadd.f32 %v687, %v657
        %v689 = vadd.f32 %v688, %v658
        %v690 = vadd.f32 %v689, %v659
        %v691 = vadd.f32 %v690, %v660
        %v692 = vadd.f32 %v691, %v661
        %v693 = vadd.f32 %v692, %v662
        %v694 = vadd.f32 %v693, %v663
        %v695 = vadd.f32 %v694, %v664
        %v696 = vadd.f32 %v695, %v665
        %v697 = vadd.f32 %v696, %v666
        %v698 = vadd.f32 %v697, %v667
        %v699 = vadd.f32 %v698, %v668
        %v700 = vadd.f32 %v699, %v669
        %v701 = vadd.f32 %v700, %v670
        %v702 = vadd.f32 %v701, %v671
        %v703 = vrot.slane %v702, 4
        %v704 = vadd.f32 %v702, %v703
        %v705 = vrot.slane %v704, 2
        %v706 = vadd.f32 %v704, %v705
        %v707 = vrot.slane %v706, 1
        %v708 = vadd.f32 %v706, %v707
        %vm709 = vcmask 1040384
        %v710 = vsel %vm709, %v639, %v708
        %711 = vst [vmem:[%s214] sm:$0x3] %v710
        %s712 = sand.u32 %s80, 1
        %s713 = scalar_lea.sflag [#allocation4], %s712
        %s714 = sand.u32 %s80, 1
        %s715 = smul.addr %s714, 256
        %s716 = scalar_lea.vmem [#allocation7], %s715
        %s717 = sand.u32 %s106, 1
        %s718 = scalar_lea.sflag [#allocation9], %s717
        %s719 = sand.u32 %s106, 1
        %s720 = smul.addr %s719, 2
        %s721 = scalar_lea.vmem [#allocation8], %s720
        // Predicated region
        $region37: #{tpu_custom_call.1} parent=27 // pred_check
          %p722 = pneg %p90
        $region38: #{tpu_custom_call.1} parent=27 // pred_check_branch
          %724 = sbr.rel (%p722) target = $region40
        $region39: #{tpu_custom_call.1} parent=27 // pred_region
          %s725 = smul.u32 32, %s25
          %s727 = ssub.s32 4096, 4096
          %728 = vsyncadd %s713, %s727
          %s729 = smul.addr %s725, 128
          %s730 = scalar_lea.hbm %s2, %s729
          %s731 = sshll.u32 %s716, 4
          %s732 = int_to_ptr.vmem [resolvable:$true] %s731
          %737 = dma.vmem_to_hbm [thread:$0]  %s732, 4096, %s730, %s713, 128, 128, 8
        $region40: #{tpu_custom_call.1} parent=27 // pred_fallthru
          _
        // Predicated region
        $region41: #{tpu_custom_call.1} parent=27 // pred_check
          %p738 = pneg %p116
        $region42: #{tpu_custom_call.1} parent=27 // pred_check_branch
          %740 = sbr.rel (%p738) target = $region44
        $region43: #{tpu_custom_call.1} parent=27 // pred_region
          %s742 = ssub.s32 32, 32
          %743 = vsyncadd %s718, %s742
          %s744 = smul.addr %s25, 32
          %s745 = scalar_lea.hbm %s3, %s744
          %s747 = sshll.u32 %s721, 4
          %s748 = int_to_ptr.vmem [resolvable:$true] %s747
          %750 = dma.vmem_to_hbm [thread:$0]  %s748, 32, %s745, %s718
        $region44: #{tpu_custom_call.1} parent=27 // pred_fallthru
          _
      $region28: #{tpu_custom_call.1} parent=5 // pred_fallthru
        _
      %p751 = scmp.le.s32.totalorder 2, %s20
      // Predicated region
      $region45: #{tpu_custom_call.1} parent=5 // pred_check
        %p752 = pneg %p751
      $region46: #{tpu_custom_call.1} parent=5 // pred_check_branch
        %754 = sbr.rel (%p752) target = $region48
      $region47: #{tpu_custom_call.1} parent=5 // pred_region
        %s755 = ssub.s32 %s20, 2
        // Predicated region
        $region49: #{tpu_custom_call.1} parent=47 // pred_check
          %p756 = pneg %p96
        $region50: #{tpu_custom_call.1} parent=47 // pred_check_branch
          %758 = sbr.rel (%p756) target = $region52
        $region51: #{tpu_custom_call.1} parent=47 // pred_region
          %s759 = sand.u32 %s81, 1
          %s760 = scalar_lea.sflag [#allocation4], %s759
          %s761 = sand.u32 %s81, 1
          %s762 = smul.addr %s761, 256
          %s763 = scalar_lea.vmem [#allocation7], %s762
          %764 = dma.done %s760, 4096
        $region52: #{tpu_custom_call.1} parent=47 // pred_fallthru
          _
        // Predicated region
        $region53: #{tpu_custom_call.1} parent=47 // pred_check
          %p765 = pneg %p122
        $region54: #{tpu_custom_call.1} parent=47 // pred_check_branch
          %767 = sbr.rel (%p765) target = $region56
        $region55: #{tpu_custom_call.1} parent=47 // pred_region
          %s768 = sand.u32 %s107, 1
          %s769 = scalar_lea.sflag [#allocation9], %s768
          %s770 = sand.u32 %s107, 1
          %s771 = smul.addr %s770, 2
          %s772 = scalar_lea.vmem [#allocation8], %s771
          %773 = dma.done %s769, 32
        $region56: #{tpu_custom_call.1} parent=47 // pred_fallthru
          _
      $region48: #{tpu_custom_call.1} parent=5 // pred_fallthru
        _
    $region6: #{tpu_custom_call.1} parent=1 // loop_footer
      %s24 = sadd.s32 1, %s20
    $region7: #{tpu_custom_call.1} parent=1 // loop_footer_branch
      %19 = sbr.rel target = $region3
    $region8: #{tpu_custom_call.1} parent=1 // loop_exit
      _
    %774 = vsyncpa [#allocation3], 1
    %s775 = scalar_lea.sflag [#allocation3], 1
    %776 = vsyncpa %s775, 1
    %777 = vsyncpa [#allocation6], 1
    %778 = vsyncpa [#allocation4], 1
    %s779 = scalar_lea.sflag [#allocation4], 1
    %780 = vsyncpa %s779, 1
    %781 = vsyncpa [#allocation9], 1
    %s782 = scalar_lea.sflag [#allocation9], 1
    %783 = vsyncpa %s782, 1

</llo_original>
